<compile_context>
chip_gen: v7x
topology: tpu7x:2x2x1
jax: 0.10.0
libtpu: 0.0.40
codegen_flags: <defaults>
</compile_context>

<pallas_src>
import jax
import jax.numpy as jnp
from jax.experimental import pallas as pl
from jax.experimental.pallas import tpu as pltpu


TILE_B_DEFAULT = 512  # sweep 512/1024 per generation; keep modest for v7x VMEM


def tetris_mlp_kernel(x_ref, w1_ref, b1_ref, w2_ref, b2_ref, w3_ref, b3_ref,
                      o_ref):
    """Fused 3-layer MLP, batch-on-lane layout.

    x_ref:  (5, TILE_B)   bf16
    w*_ref: (out, in)     bf16   (resident across grid steps)
    b*_ref: (out, 1)      f32    (resident across grid steps)
    o_ref:  (1, TILE_B)   f32
    """
    x = x_ref[...]                                                # (5, TB) bf16
    h1 = jnp.dot(w1_ref[...], x,
                 preferred_element_type=jnp.float32) + b1_ref[...]
    h1 = jnp.maximum(h1, 0.0)                                     # (64, TB) f32
    h2 = jnp.dot(w2_ref[...], h1.astype(jnp.bfloat16),
                 preferred_element_type=jnp.float32) + b2_ref[...]
    h2 = jnp.maximum(h2, 0.0)                                     # (32, TB) f32
    o_ref[...] = jnp.dot(w3_ref[...], h2.astype(jnp.bfloat16),
                         preferred_element_type=jnp.float32) + b3_ref[...]


def _round_up(n, m):
    return ((n + m - 1) // m) * m


def tetris_nn_forward(x, params, tile_b=TILE_B_DEFAULT):
    """x: (B, 5) float32. params: w1,b1,w2,b2,w3,b3 with W in (out, in), b in (out, 1)."""
    B = x.shape[0]
    # Tile must be a multiple of 128 (lane width); don't over-tile tiny batches.
    tile_b = min(tile_b, _round_up(B, 128))
    b_pad = _round_up(B, tile_b)
    num_tiles = pl.cdiv(b_pad, tile_b)

    # Lane-dense layout: batch on the lane (last) axis -> (5, B_pad), bf16.
    xt = jnp.zeros((5, b_pad), jnp.bfloat16)
    xt = xt.at[:, :B].set(x.T.astype(jnp.bfloat16))

    w1 = params["w1"].astype(jnp.bfloat16)
    w2 = params["w2"].astype(jnp.bfloat16)
    w3 = params["w3"].astype(jnp.bfloat16)
    b1, b2, b3 = params["b1"], params["b2"], params["b3"]

    def resident(arr):
        # Full-array block, same block every grid step -> stays in VMEM.
        return pl.BlockSpec(arr.shape, lambda i: (0, 0))

    out = pl.pallas_call(
        tetris_mlp_kernel,
        out_shape=jax.ShapeDtypeStruct((1, b_pad), jnp.float32),
        grid=(num_tiles,),
        in_specs=[
            pl.BlockSpec((5, tile_b), lambda i: (0, i)),   # x tile, lane-dense
            resident(w1), resident(b1),
            resident(w2), resident(b2),
            resident(w3), resident(b3),
        ],
        out_specs=pl.BlockSpec((1, tile_b), lambda i: (0, i)),
        compiler_params=pltpu.CompilerParams(
            dimension_semantics=("parallel",)),             # 2 TCs on v7x
    )(xt, w1, b1, w2, b2, w3, b3)

    return out[:, :B].T                                     # (B, 1) float32


def init_params(key):
    """Deterministic init mirroring nn.Linear: W in (out, in), b in (out, 1)."""
    def linear(key, fan_in, fan_out):
        kw, kb = jax.random.split(key)
        bound = 1.0 / jnp.sqrt(float(fan_in))
        w = jax.random.uniform(kw, (fan_out, fan_in), jnp.float32,
                               minval=-bound, maxval=bound)
        b = jax.random.uniform(kb, (fan_out, 1), jnp.float32,
                               minval=-bound, maxval=bound)
        return w, b

    k1, k2, k3 = jax.random.split(key, 3)
    w1, b1 = linear(k1, 5, 64)
    w2, b2 = linear(k2, 64, 32)
    w3, b3 = linear(k3, 32, 1)
    return {"w1": w1, "b1": b1, "w2": w2, "b2": b2, "w3": w3, "b3": b3}


def reference_forward(x, p, bf16=True):
    """Pure-JAX reference. bf16=True mirrors the kernel's MXU input casts."""
    cast = (lambda a: a.astype(jnp.bfloat16)) if bf16 else (lambda a: a)
    h1 = jnp.maximum(
        jnp.dot(cast(p["w1"]), cast(x.T),
                preferred_element_type=jnp.float32) + p["b1"], 0.0)
    h2 = jnp.maximum(
        jnp.dot(cast(p["w2"]), cast(h1),
                preferred_element_type=jnp.float32) + p["b2"], 0.0)
    o = jnp.dot(cast(p["w3"]), cast(h2),
                preferred_element_type=jnp.float32) + p["b3"]
    return o.T


if __name__ == "__main__":
    key = jax.random.PRNGKey(0)
    kx, kp = jax.random.split(key)

    batch = 8
    x = jax.random.normal(kx, (batch, 5), jnp.float32)
    params = init_params(kp)

    out = tetris_nn_forward(x, params)
    out = jax.block_until_ready(out)
    assert out.shape == (batch, 1)

    # Match the kernel's bf16-input / f32-accumulate numerics.
    ref_bf16 = reference_forward(x, params, bf16=True)
    assert jnp.allclose(out, ref_bf16, atol=1e-3, rtol=1e-3)

    # Sanity check against the full-f32 reference (loose tolerance for bf16).
    ref_f32 = reference_forward(x, params, bf16=False)
    assert jnp.allclose(out, ref_f32, atol=5e-2, rtol=5e-2)

    print("KERNEL_OK")
</pallas_src>

<mosaic_0001>
module attributes {stable_mosaic.version = 11 : i64} {
  func.func @tetris_mlp_kernel(%arg0: i32, %arg1: memref<5x128xbf16, #tpu.memory_space<vmem>>, %arg2: memref<64x5xbf16, #tpu.memory_space<vmem>>, %arg3: memref<64x1xf32, #tpu.memory_space<vmem>>, %arg4: memref<32x64xbf16, #tpu.memory_space<vmem>>, %arg5: memref<32x1xf32, #tpu.memory_space<vmem>>, %arg6: memref<1x32xbf16, #tpu.memory_space<vmem>>, %arg7: memref<1x1xf32, #tpu.memory_space<vmem>>, %arg8: memref<1x128xf32, #tpu.memory_space<vmem>>) attributes {dimension_semantics = [#tpu.dimension_semantics<parallel>], iteration_bounds = array<i64: 1>, scalar_prefetch = 0 : i64, scratch_operands = 0 : i64, tpu.core_type = #tpu.core_type<tc>, window_params = [{transform_indices = @transform_0, window_bounds = array<i64: 5, 128>}, {pipeline_mode = #tpu.pipeline_mode<synchronous>, transform_indices = @transform_1, window_bounds = array<i64: 64, 5>}, {pipeline_mode = #tpu.pipeline_mode<synchronous>, transform_indices = @transform_2, window_bounds = array<i64: 64, 1>}, {pipeline_mode = #tpu.pipeline_mode<synchronous>, transform_indices = @transform_3, window_bounds = array<i64: 32, 64>}, {pipeline_mode = #tpu.pipeline_mode<synchronous>, transform_indices = @transform_4, window_bounds = array<i64: 32, 1>}, {pipeline_mode = #tpu.pipeline_mode<synchronous>, transform_indices = @transform_5, window_bounds = array<i64: 1, 32>}, {pipeline_mode = #tpu.pipeline_mode<synchronous>, transform_indices = @transform_6, window_bounds = array<i64: 1, 1>}, {transform_indices = @transform_7, window_bounds = array<i64: 1, 128>}]} {
    %c0 = arith.constant 0 : index
    %c0_0 = arith.constant 0 : index
    %0 = vector.load %arg1[%c0, %c0_0] : memref<5x128xbf16, #tpu.memory_space<vmem>>, vector<5x128xbf16>
    %c0_1 = arith.constant 0 : index
    %c0_2 = arith.constant 0 : index
    %1 = vector.load %arg2[%c0_1, %c0_2] : memref<64x5xbf16, #tpu.memory_space<vmem>>, vector<64x5xbf16>
    %cst = arith.constant dense<0.000000e+00> : vector<64x128xf32>
    %2 = tpu.matmul %1, %0, %cst {dimension_numbers = #tpu.dot_dimension_numbers<[1], [0], [0], [1], [0, 0, 1, 1], [], []>} : vector<64x5xbf16>, vector<5x128xbf16>, vector<64x128xf32> -> vector<64x128xf32>
    %c0_3 = arith.constant 0 : index
    %c0_4 = arith.constant 0 : index
    %3 = vector.load %arg3[%c0_3, %c0_4] : memref<64x1xf32, #tpu.memory_space<vmem>>, vector<64x1xf32>
    %4 = vector.broadcast %3 : vector<64x1xf32> to vector<64x128xf32>
    %5 = arith.addf %2, %4 : vector<64x128xf32>
    %cst_5 = arith.constant 0.000000e+00 : f32
    %6 = vector.broadcast %cst_5 : f32 to vector<64x128xf32>
    %7 = arith.maximumf %5, %6 : vector<64x128xf32>
    %c0_6 = arith.constant 0 : index
    %c0_7 = arith.constant 0 : index
    %8 = vector.load %arg4[%c0_6, %c0_7] : memref<32x64xbf16, #tpu.memory_space<vmem>>, vector<32x64xbf16>
    %9 = arith.truncf %7 : vector<64x128xf32> to vector<64x128xbf16>
    %cst_8 = arith.constant dense<0.000000e+00> : vector<32x128xf32>
    %10 = tpu.matmul %8, %9, %cst_8 {dimension_numbers = #tpu.dot_dimension_numbers<[1], [0], [0], [1], [0, 0, 1, 1], [], []>} : vector<32x64xbf16>, vector<64x128xbf16>, vector<32x128xf32> -> vector<32x128xf32>
    %c0_9 = arith.constant 0 : index
    %c0_10 = arith.constant 0 : index
    %11 = vector.load %arg5[%c0_9, %c0_10] : memref<32x1xf32, #tpu.memory_space<vmem>>, vector<32x1xf32>
    %12 = vector.broadcast %11 : vector<32x1xf32> to vector<32x128xf32>
    %13 = arith.addf %10, %12 : vector<32x128xf32>
    %cst_11 = arith.constant 0.000000e+00 : f32
    %14 = vector.broadcast %cst_11 : f32 to vector<32x128xf32>
    %15 = arith.maximumf %13, %14 : vector<32x128xf32>
    %c0_12 = arith.constant 0 : index
    %c0_13 = arith.constant 0 : index
    %16 = vector.load %arg6[%c0_12, %c0_13] : memref<1x32xbf16, #tpu.memory_space<vmem>>, vector<1x32xbf16>
    %17 = arith.truncf %15 : vector<32x128xf32> to vector<32x128xbf16>
    %cst_14 = arith.constant dense<0.000000e+00> : vector<1x128xf32>
    %18 = tpu.matmul %16, %17, %cst_14 {dimension_numbers = #tpu.dot_dimension_numbers<[1], [0], [0], [1], [0, 0, 1, 1], [], []>} : vector<1x32xbf16>, vector<32x128xbf16>, vector<1x128xf32> -> vector<1x128xf32>
    %c0_15 = arith.constant 0 : index
    %c0_16 = arith.constant 0 : index
    %19 = vector.load %arg7[%c0_15, %c0_16] : memref<1x1xf32, #tpu.memory_space<vmem>>, vector<1x1xf32>
    %20 = vector.broadcast %19 : vector<1x1xf32> to vector<1x128xf32>
    %21 = arith.addf %18, %20 : vector<1x128xf32>
    %c0_17 = arith.constant 0 : index
    %c0_18 = arith.constant 0 : index
    %22 = vector.load %arg8[%c0_17, %c0_18] : memref<1x128xf32, #tpu.memory_space<vmem>>, vector<1x128xf32>
    tpu.vector_store %arg8[%c0_17, %c0_18], %21 {strides = array<i32>} : memref<1x128xf32, #tpu.memory_space<vmem>>, vector<1x128xf32>,
    return
  }
  func.func @transform_0(%arg0: i32) -> (i32, i32) {
    %c0_i32 = arith.constant 0 : i32
    %c0_i32_0 = arith.constant 0 : i32
    return %c0_i32, %arg0 : i32, i32
  }
  func.func @transform_1(%arg0: i32) -> (i32, i32) {
    %c0_i32 = arith.constant 0 : i32
    %c0_i32_0 = arith.constant 0 : i32
    %c0_i32_1 = arith.constant 0 : i32
    return %c0_i32, %c0_i32_0 : i32, i32
  }
  func.func @transform_2(%arg0: i32) -> (i32, i32) {
    %c0_i32 = arith.constant 0 : i32
    %c0_i32_0 = arith.constant 0 : i32
    %c0_i32_1 = arith.constant 0 : i32
    return %c0_i32, %c0_i32_0 : i32, i32
  }
  func.func @transform_3(%arg0: i32) -> (i32, i32) {
    %c0_i32 = arith.constant 0 : i32
    %c0_i32_0 = arith.constant 0 : i32
    %c0_i32_1 = arith.constant 0 : i32
    return %c0_i32, %c0_i32_0 : i32, i32
  }
  func.func @transform_4(%arg0: i32) -> (i32, i32) {
    %c0_i32 = arith.constant 0 : i32
    %c0_i32_0 = arith.constant 0 : i32
    %c0_i32_1 = arith.constant 0 : i32
    return %c0_i32, %c0_i32_0 : i32, i32
  }
  func.func @transform_5(%arg0: i32) -> (i32, i32) {
    %c0_i32 = arith.constant 0 : i32
    %c0_i32_0 = arith.constant 0 : i32
    %c0_i32_1 = arith.constant 0 : i32
    return %c0_i32, %c0_i32_0 : i32, i32
  }
  func.func @transform_6(%arg0: i32) -> (i32, i32) {
    %c0_i32 = arith.constant 0 : i32
    %c0_i32_0 = arith.constant 0 : i32
    %c0_i32_1 = arith.constant 0 : i32
    return %c0_i32, %c0_i32_0 : i32, i32
  }
  func.func @transform_7(%arg0: i32) -> (i32, i32) {
    %c0_i32 = arith.constant 0 : i32
    %c0_i32_0 = arith.constant 0 : i32
    return %c0_i32, %arg0 : i32, i32
  }
}

</mosaic_0001>

<llo_original>
// kernel: tpu_custom_call.1
$region0: #{tpu_custom_call.1}
  #allocation0 [shape = 'u32[]', space=smem, size = 0x4, offset = 0x4, fixed_abs, tag = 'smem constant byte address 0x4 - core index']
  #allocation1 [shape = 'u32[144,128]{1,0:T(1,128)}', space=vmem, size = 0x12000, scoped, tag = 'internal scratch']
  #allocation2 [shape = 'f32[1,1]{1,0:T(1,128)S(1)}', space=vmem, size = 0x200, scoped, tag = 'scoped memory for tpu_custom_call.1']
  %s0 = inlined_call_operand.vmem [shape: bf16[5,128], index: 0, kind: input, shape index: {}]
  %s1 = inlined_call_operand.vmem [shape: bf16[64,5], index: 1, kind: input, shape index: {}]
  %s2 = inlined_call_operand.vmem [shape: f32[64,1], index: 2, kind: input, shape index: {}]
  %s3 = inlined_call_operand.vmem [shape: bf16[32,64], index: 3, kind: input, shape index: {}]
  %s4 = inlined_call_operand.vmem [shape: f32[32,1], index: 4, kind: input, shape index: {}]
  %s5 = inlined_call_operand.vmem [shape: bf16[1,32], index: 5, kind: input, shape index: {}]
  %s6 = inlined_call_operand.<no memory space> [shape: f32[1,1], index: 6, kind: input, shape index: {}]
  %s7 = inlined_call_operand.hbm [shape: f32[1,128], index: 7, kind: output, shape index: {}]
  %s8 = sld [smem:[#allocation0]]
  $region38: #{tpu_custom_call.1} parent=0
    _
  %s10 = ssub.s32 1, %s8
  %s11 = scalar_select 0, %s10, %s8
  %v12 = vstv %s6
  %13 = vst [vmem:[#allocation2] sm:$0x1] %v12
  $region1: #{tpu_custom_call.1} parent=0
    #allocation3 [shape = 'u8[512]{0}', space=vmem, size = 0x400, scoped, tag = 'output window, operand 0, single buffered']
    #allocation4 [shape = 's32[1]{0}', space=sflag, size = 0x4, scoped, tag = 'scoped memory for tpu_custom_call.1']
    %14 = vsyncpa [#allocation4], 0
    // Predicated region
    $region2: #{tpu_custom_call.1} parent=1 // pred_check
      _
    $region3: #{tpu_custom_call.1} parent=1 // pred_check_branch
      %16 = sbr.rel (0) target = $region5
    $region4: #{tpu_custom_call.1} parent=1 // pred_region
      _
    $region5: #{tpu_custom_call.1} parent=1 // pred_fallthru
      _
    // Predicated region
    $region6: #{tpu_custom_call.1} parent=1 // pred_check
      _
    $region7: #{tpu_custom_call.1} parent=1 // pred_check_branch
      %18 = sbr.rel (0) target = $region9
    $region8: #{tpu_custom_call.1} parent=1 // pred_region
      _
    $region9: #{tpu_custom_call.1} parent=1 // pred_fallthru
      _
    // Predicated region
    $region10: #{tpu_custom_call.1} parent=1 // pred_check
      _
    $region11: #{tpu_custom_call.1} parent=1 // pred_check_branch
      %20 = sbr.rel (0) target = $region13
    $region12: #{tpu_custom_call.1} parent=1 // pred_region
      _
    $region13: #{tpu_custom_call.1} parent=1 // pred_fallthru
      _
    // Predicated region
    $region14: #{tpu_custom_call.1} parent=1 // pred_check
      _
    $region15: #{tpu_custom_call.1} parent=1 // pred_check_branch
      %22 = sbr.rel (0) target = $region17
    $region16: #{tpu_custom_call.1} parent=1 // pred_region
      _
    $region17: #{tpu_custom_call.1} parent=1 // pred_fallthru
      _
    // Predicated region
    $region18: #{tpu_custom_call.1} parent=1 // pred_check
      _
    $region19: #{tpu_custom_call.1} parent=1 // pred_check_branch
      %24 = sbr.rel (0) target = $region21
    $region20: #{tpu_custom_call.1} parent=1 // pred_region
      _
    $region21: #{tpu_custom_call.1} parent=1 // pred_fallthru
      _
    // Predicated region
    $region22: #{tpu_custom_call.1} parent=1 // pred_check
      _
    $region23: #{tpu_custom_call.1} parent=1 // pred_check_branch
      %26 = sbr.rel (0) target = $region25
    $region24: #{tpu_custom_call.1} parent=1 // pred_region
      _
    $region25: #{tpu_custom_call.1} parent=1 // pred_fallthru
      _
    // Predicated region
    $region26: #{tpu_custom_call.1} parent=1 // pred_check
      _
    $region27: #{tpu_custom_call.1} parent=1 // pred_check_branch
      %28 = sbr.rel (0) target = $region29
    $region28: #{tpu_custom_call.1} parent=1 // pred_region
      _
    $region29: #{tpu_custom_call.1} parent=1 // pred_fallthru
      _
    %v30 = vld [vmem:[%s0] sm:$0x7]
    %v31 = vld [vmem:[%s1] sm:$0xf]
    %v32 = vld [vmem:[%s1 + $0x4] sm:$0xf]
    %v33 = vld [vmem:[%s1 + $0x8] sm:$0xf]
    %v34 = vld [vmem:[%s1 + $0xc] sm:$0xf]
    %v35 = vld [vmem:[%s1 + $0x10] sm:$0xf]
    %v36 = vld [vmem:[%s1 + $0x14] sm:$0xf]
    %v37 = vld [vmem:[%s1 + $0x18] sm:$0xf]
    %v38 = vld [vmem:[%s1 + $0x1c] sm:$0xf]
    %v39 = vld [vmem:[%s2] sm:$0xff]
    %v40 = vld [vmem:[%s2 + $0x8] sm:$0xff]
    %v41 = vld [vmem:[%s2 + $0x10] sm:$0xff]
    %v42 = vld [vmem:[%s2 + $0x18] sm:$0xff]
    %v43 = vld [vmem:[%s2 + $0x20] sm:$0xff]
    %v44 = vld [vmem:[%s2 + $0x28] sm:$0xff]
    %v45 = vld [vmem:[%s2 + $0x30] sm:$0xff]
    %v46 = vld [vmem:[%s2 + $0x38] sm:$0xff]
    %48 = vset.pattern.permute.xlu0 0
    %49 = vperm.xlu0 %48, %v39
    %v50 = vpop.permute.xlu0 %49
    %53 = vset.pattern.permute.xlu0 0
    %54 = vperm.xlu0 %53, %v40
    %v55 = vpop.permute.xlu0 %54
    %58 = vset.pattern.permute.xlu0 0
    %59 = vperm.xlu0 %58, %v41
    %v60 = vpop.permute.xlu0 %59
    %63 = vset.pattern.permute.xlu0 0
    %64 = vperm.xlu0 %63, %v42
    %v65 = vpop.permute.xlu0 %64
    %68 = vset.pattern.permute.xlu0 0
    %69 = vperm.xlu0 %68, %v43
    %v70 = vpop.permute.xlu0 %69
    %73 = vset.pattern.permute.xlu0 0
    %74 = vperm.xlu0 %73, %v44
    %v75 = vpop.permute.xlu0 %74
    %78 = vset.pattern.permute.xlu0 0
    %79 = vperm.xlu0 %78, %v45
    %v80 = vpop.permute.xlu0 %79
    %83 = vset.pattern.permute.xlu0 0
    %84 = vperm.xlu0 %83, %v46
    %v85 = vpop.permute.xlu0 %84
    %v95 = vunpack.c.l.b16 %v31
    %v96 = vunpack.c.l.b16 %v32
    %v97 = vunpack.c.l.b16 %v33
    %v98 = vunpack.c.l.b16 %v34
    %v99 = vunpack.c.l.b16 %v35
    %v100 = vunpack.c.l.b16 %v36
    %v101 = vunpack.c.l.b16 %v37
    %v102 = vunpack.c.l.b16 %v38
    %v103 = vpack.c.b16 %v96, %v95
    %v104 = vpack.c.b16 %v98, %v97
    %v105 = vpack.c.b16 %v100, %v99
    %v106 = vpack.c.b16 %v102, %v101
    %vm107 = vcmask 39936
    %v109 = vsel %vm107, %v103, 0
    %v112 = vsel %vm107, %v104, 0
    %v115 = vsel %vm107, %v105, 0
    %v118 = vsel %vm107, %v106, 0
    %vm120 = vcmask 1041408
    %vm121 = vcmask 1042432
    %v122 = vsel %vm120, 4294967295, 65535
    %v123 = vsel %vm121, %v122, 0
    %v125 = vand.u32 %v30, %v123
    %127 = vmatprep.subr.bf16.mxu0 0
    %128 = vmatpush1.bf16.msra.mxu0 %v125
    %129 = vmatprep.subr.bf16.mxu0 0
    %130 = vmatpush1.bf16.msra.mxu0 0
    %131 = vmatprep.subr.bf16.mxu0 0
    %132 = vmatpush1.bf16.msra.mxu0 0
    %133 = vmatprep.subr.bf16.mxu0 0
    %134 = vmatpush1.bf16.msra.mxu0 0
    %135 = vmatprep.subr.bf16.mxu0 0
    %136 = vmatpush1.bf16.msra.mxu0 0
    %137 = vmatprep.subr.bf16.mxu0 0
    %138 = vmatpush1.bf16.msra.mxu0 0
    %139 = vmatprep.subr.bf16.mxu0 0
    %140 = vmatpush1.bf16.msra.mxu0 0
    %141 = vmatprep.subr.bf16.mxu0 0
    %142 = vmatpush1.bf16.msra.mxu0 0
    %143 = vmatprep.subr.bf16.mxu0 0
    %144 = vmatpush1.bf16.msra.mxu0 0
    %145 = vmatprep.subr.bf16.mxu0 0
    %146 = vmatpush1.bf16.msra.mxu0 0
    %147 = vmatprep.subr.bf16.mxu0 0
    %148 = vmatpush1.bf16.msra.mxu0 0
    %149 = vmatprep.subr.bf16.mxu0 0
    %150 = vmatpush1.bf16.msra.mxu0 0
    %151 = vmatprep.subr.bf16.mxu0 0
    %152 = vmatpush1.bf16.msra.mxu0 0
    %153 = vmatprep.subr.bf16.mxu0 0
    %154 = vmatpush1.bf16.msra.mxu0 0
    %155 = vmatprep.subr.bf16.mxu0 0
    %156 = vmatpush1.bf16.msra.mxu0 0
    %157 = vmatprep.subr.bf16.mxu0 0
    %158 = vmatpush1.bf16.msra.mxu0 0
    %159 = vmatprep.mubr.bf16.mxu0 0
    %160 = vmatmul.mubr.bf16.gmra.mrb[0].mxu0 %v109
    %v161 = vpop.f32.mrb[0].mxu0
    %v162 = vadd.f32 %v50, %v161
    %v163 = vpop.f32.mrb[0].mxu0
    %v164 = vpop.f32.mrb[0].mxu0
    %v165 = vadd.f32 %v55, %v164
    %v166 = vpop.f32.mrb[0].mxu0
    %167 = vmatprep.mubr.bf16.mxu0 0
    %168 = vmatmul.mubr.bf16.gmra.mrb[0].mxu0 %v112
    %v169 = vpop.f32.mrb[0].mxu0
    %v170 = vadd.f32 %v60, %v169
    %v171 = vpop.f32.mrb[0].mxu0
    %v172 = vpop.f32.mrb[0].mxu0
    %v173 = vadd.f32 %v65, %v172
    %v174 = vpop.f32.mrb[0].mxu0
    %175 = vmatprep.mubr.bf16.mxu0 0
    %176 = vmatmul.mubr.bf16.gmra.mrb[0].mxu0 %v115
    %v177 = vpop.f32.mrb[0].mxu0
    %v178 = vadd.f32 %v70, %v177
    %v179 = vpop.f32.mrb[0].mxu0
    %v180 = vpop.f32.mrb[0].mxu0
    %v181 = vadd.f32 %v75, %v180
    %v182 = vpop.f32.mrb[0].mxu0
    %183 = vmatprep.mubr.bf16.mxu0 0
    %184 = vmatmul.mubr.bf16.gmra.mrb[0].mxu0 %v118
    %v185 = vpop.f32.mrb[0].mxu0
    %v186 = vadd.f32 %v80, %v185
    %v187 = vpop.f32.mrb[0].mxu0
    %v188 = vpop.f32.mrb[0].mxu0
    %v189 = vadd.f32 %v85, %v188
    %v190 = vpop.f32.mrb[0].mxu0
    %191 = vdwg.mxu0
    %v192 = vmax.f32 %v162, 0.0
    %v193 = vmax.f32 %v165, 0.0
    %v194 = vmax.f32 %v170, 0.0
    %v195 = vmax.f32 %v173, 0.0
    %v196 = vmax.f32 %v178, 0.0
    %v197 = vmax.f32 %v181, 0.0
    %v198 = vmax.f32 %v186, 0.0
    %v199 = vmax.f32 %v189, 0.0
    %v200 = vld [vmem:[%s3] sm:$0xf]
    %v201 = vld [vmem:[%s3 + $0x4] sm:$0xf]
    %v202 = vld [vmem:[%s3 + $0x8] sm:$0xf]
    %v203 = vld [vmem:[%s3 + $0xc] sm:$0xf]
    %v204 = vpack.c.bf16 %v193, %v192
    %v205 = vpack.c.bf16 %v195, %v194
    %v206 = vpack.c.bf16 %v197, %v196
    %v207 = vpack.c.bf16 %v199, %v198
    %v208 = vld [vmem:[%s4] sm:$0xff]
    %v209 = vld [vmem:[%s4 + $0x8] sm:$0xff]
    %v210 = vld [vmem:[%s4 + $0x10] sm:$0xff]
    %v211 = vld [vmem:[%s4 + $0x18] sm:$0xff]
    %213 = vset.pattern.permute.xlu0 0
    %214 = vperm.xlu0 %213, %v208
    %v215 = vpop.permute.xlu0 %214
    %218 = vset.pattern.permute.xlu0 0
    %219 = vperm.xlu0 %218, %v209
    %v220 = vpop.permute.xlu0 %219
    %223 = vset.pattern.permute.xlu0 0
    %224 = vperm.xlu0 %223, %v210
    %v225 = vpop.permute.xlu0 %224
    %228 = vset.pattern.permute.xlu0 0
    %229 = vperm.xlu0 %228, %v211
    %v230 = vpop.permute.xlu0 %229
    %v236 = vunpack.c.l.b16 %v200
    %v237 = vunpack.c.l.b16 %v201
    %v238 = vunpack.c.l.b16 %v202
    %v239 = vunpack.c.l.b16 %v203
    %v240 = vpack.c.b16 %v237, %v236
    %v241 = vpack.c.b16 %v239, %v238
    %vm242 = vcmask 523264
    %v244 = vsel %vm242, %v240, 0
    %v247 = vsel %vm242, %v241, 0
    %249 = vmatprep.subr.bf16.mxu0 0
    %250 = vmatpush1.bf16.msra.mxu0 %v204
    %251 = vmatprep.subr.bf16.mxu0 0
    %252 = vmatpush1.bf16.msra.mxu0 %v205
    %253 = vmatprep.subr.bf16.mxu0 0
    %254 = vmatpush1.bf16.msra.mxu0 %v206
    %255 = vmatprep.subr.bf16.mxu0 0
    %256 = vmatpush1.bf16.msra.mxu0 %v207
    %257 = vmatprep.subr.bf16.mxu0 0
    %258 = vmatpush1.bf16.msra.mxu0 0
    %259 = vmatprep.subr.bf16.mxu0 0
    %260 = vmatpush1.bf16.msra.mxu0 0
    %261 = vmatprep.subr.bf16.mxu0 0
    %262 = vmatpush1.bf16.msra.mxu0 0
    %263 = vmatprep.subr.bf16.mxu0 0
    %264 = vmatpush1.bf16.msra.mxu0 0
    %265 = vmatprep.subr.bf16.mxu0 0
    %266 = vmatpush1.bf16.msra.mxu0 0
    %267 = vmatprep.subr.bf16.mxu0 0
    %268 = vmatpush1.bf16.msra.mxu0 0
    %269 = vmatprep.subr.bf16.mxu0 0
    %270 = vmatpush1.bf16.msra.mxu0 0
    %271 = vmatprep.subr.bf16.mxu0 0
    %272 = vmatpush1.bf16.msra.mxu0 0
    %273 = vmatprep.subr.bf16.mxu0 0
    %274 = vmatpush1.bf16.msra.mxu0 0
    %275 = vmatprep.subr.bf16.mxu0 0
    %276 = vmatpush1.bf16.msra.mxu0 0
    %277 = vmatprep.subr.bf16.mxu0 0
    %278 = vmatpush1.bf16.msra.mxu0 0
    %279 = vmatprep.subr.bf16.mxu0 0
    %280 = vmatpush1.bf16.msra.mxu0 0
    %281 = vmatprep.mubr.bf16.mxu0 0
    %282 = vmatmul.mubr.bf16.gmra.mrb[0].mxu0 %v244
    %v283 = vpop.f32.mrb[0].mxu0
    %v284 = vadd.f32 %v215, %v283
    %v285 = vpop.f32.mrb[0].mxu0
    %v286 = vpop.f32.mrb[0].mxu0
    %v287 = vadd.f32 %v220, %v286
    %v288 = vpop.f32.mrb[0].mxu0
    %289 = vmatprep.mubr.bf16.mxu0 0
    %290 = vmatmul.mubr.bf16.gmra.mrb[0].mxu0 %v247
    %v291 = vpop.f32.mrb[0].mxu0
    %v292 = vadd.f32 %v225, %v291
    %v293 = vpop.f32.mrb[0].mxu0
    %v294 = vpop.f32.mrb[0].mxu0
    %v295 = vadd.f32 %v230, %v294
    %v296 = vpop.f32.mrb[0].mxu0
    %297 = vdwg.mxu0
    %v298 = vmax.f32 %v284, 0.0
    %v299 = vmax.f32 %v287, 0.0
    %v300 = vmax.f32 %v292, 0.0
    %v301 = vmax.f32 %v295, 0.0
    %v302 = vld [vmem:[%s5] sm:$0x1]
    %v303 = vpack.c.bf16 %v299, %v298
    %v304 = vpack.c.bf16 %v301, %v300
    %v305 = vld [vmem:[#allocation2] sm:$0x1]
    %307 = vset.pattern.permute.xlu0 0
    %308 = vperm.xlu0 %307, %v305
    %v309 = vpop.permute.xlu0 %308
    %v311 = vlaneseq
    %v312 = vshrl.u32 %v311, 7
    %v313 = vsub.s32 0, %v312
    %v314 = vrot.slane %v309, %v313
    %vm315 = vcmask 261120
    %v317 = vsel %vm315, %v302, 0
    %319 = vmatprep.subr.bf16.mxu0 0
    %320 = vmatpush1.bf16.msra.mxu0 %v303
    %321 = vmatprep.subr.bf16.mxu0 0
    %322 = vmatpush1.bf16.msra.mxu0 %v304
    %323 = vmatprep.subr.bf16.mxu0 0
    %324 = vmatpush1.bf16.msra.mxu0 0
    %325 = vmatprep.subr.bf16.mxu0 0
    %326 = vmatpush1.bf16.msra.mxu0 0
    %327 = vmatprep.subr.bf16.mxu0 0
    %328 = vmatpush1.bf16.msra.mxu0 0
    %329 = vmatprep.subr.bf16.mxu0 0
    %330 = vmatpush1.bf16.msra.mxu0 0
    %331 = vmatprep.subr.bf16.mxu0 0
    %332 = vmatpush1.bf16.msra.mxu0 0
    %333 = vmatprep.subr.bf16.mxu0 0
    %334 = vmatpush1.bf16.msra.mxu0 0
    %335 = vmatprep.subr.bf16.mxu0 0
    %336 = vmatpush1.bf16.msra.mxu0 0
    %337 = vmatprep.subr.bf16.mxu0 0
    %338 = vmatpush1.bf16.msra.mxu0 0
    %339 = vmatprep.subr.bf16.mxu0 0
    %340 = vmatpush1.bf16.msra.mxu0 0
    %341 = vmatprep.subr.bf16.mxu0 0
    %342 = vmatpush1.bf16.msra.mxu0 0
    %343 = vmatprep.subr.bf16.mxu0 0
    %344 = vmatpush1.bf16.msra.mxu0 0
    %345 = vmatprep.subr.bf16.mxu0 0
    %346 = vmatpush1.bf16.msra.mxu0 0
    %347 = vmatprep.subr.bf16.mxu0 0
    %348 = vmatpush1.bf16.msra.mxu0 0
    %349 = vmatprep.subr.bf16.mxu0 0
    %350 = vmatpush1.bf16.msra.mxu0 0
    %351 = vmatprep.mubr.bf16.mxu0 0
    %352 = vmatmul.mubr.bf16.gmra.mrb[0].mxu0 %v317
    %v353 = vpop.f32.mrb[0].mxu0
    %v354 = vadd.f32 %v314, %v353
    %v355 = vpop.f32.mrb[0].mxu0
    %v356 = vpop.f32.mrb[0].mxu0
    %v357 = vpop.f32.mrb[0].mxu0
    %358 = vdwg.mxu0
    %359 = vst [vmem:[#allocation3] sm:$0x1] %v354
    // Predicated region
    $region30: #{tpu_custom_call.1} parent=1 // pred_check
      _
    $region31: #{tpu_custom_call.1} parent=1 // pred_check_branch
      %361 = sbr.rel (0) target = $region33
    $region32: #{tpu_custom_call.1} parent=1 // pred_region
      %s363 = ssub.s32 16, 16
      %364 = vsyncadd [#allocation4], %s363
      %s366 = sshll.u32 [#allocation3], 4
      %s367 = int_to_ptr.vmem [resolvable:$true] %s366
      %369 = dma.vmem_to_hbm [thread:$0]  %s367, 16, %s7, [#allocation4]
    $region33: #{tpu_custom_call.1} parent=1 // pred_fallthru
      _
    // Predicated region
    $region34: #{tpu_custom_call.1} parent=1 // pred_check
      _
    $region35: #{tpu_custom_call.1} parent=1 // pred_check_branch
      %371 = sbr.rel (0) target = $region37
    $region36: #{tpu_custom_call.1} parent=1 // pred_region
      %372 = dma.done [#allocation4], 16
    $region37: #{tpu_custom_call.1} parent=1 // pred_fallthru
      _
    %373 = vsyncpa [#allocation4], 1

</llo_original>
